<compile_context>
chip_gen: v5e
topology: v5e:2x2
jax: 0.10.0
libtpu: 0.0.40
codegen_flags: <defaults>
</compile_context>

<pallas_src>
import functools

import jax
import jax.numpy as jnp
from jax.experimental import pallas as pl
from jax.experimental.pallas import tpu as pltpu

_DEFAULT_VMEM_CAP = 64 << 20  # conservative fallback: v7x physical per-TC VMEM


def _round_up(n, m):
    return ((n + m - 1) // m) * m


def _vmem_capacity_bytes():
    try:
        info = pltpu.get_tpu_info()
        cap = getattr(info, "vmem_capacity_bytes", None)
        if cap:
            return int(cap)
    except Exception:
        pass
    return _DEFAULT_VMEM_CAP


def _gaussian_kernel(x_ref, w_mu_ref, b_mu_ref, w_ls_ref, b_ls_ref, std_ref,
                     z_ref, mu_ref, sigma_ref):
    x = x_ref[...]

    # Two MXU matmuls with f32 accumulation (same MAC count as one fused
    # (C, 2C) matmul); writing each result straight to its output ref keeps
    # live f32 temporaries at TB*C instead of TB*2C.
    mu = jnp.dot(x, w_mu_ref[...], preferred_element_type=jnp.float32) + b_mu_ref[...]
    log_sigma_2 = jnp.dot(x, w_ls_ref[...], preferred_element_type=jnp.float32) + b_ls_ref[...]

    # Reparameterization: exp rides the EUP slot, mul/add ride the VPU.
    sigma = jnp.exp(0.5 * log_sigma_2)
    z = mu + sigma * std_ref[...]

    mu_ref[...] = mu.astype(mu_ref.dtype)
    sigma_ref[...] = sigma.astype(sigma_ref.dtype)
    z_ref[...] = z.astype(z_ref.dtype)


@functools.partial(jax.jit, static_argnames=("block_b",))
def mini_simple_gaussian(x, w_mu, b_mu, w_ls, b_ls, std_z=None, key=None, *,
                         block_b=1024):
    """miniSimpleGaussian forward.

    x:     (B, C) activations
    w_mu:  (C, C) en_mu weight, pre-transposed to (in, out) layout
    b_mu:  (C,)   en_mu bias
    w_ls:  (C, C) en_log_sigma weight, pre-transposed to (in, out) layout
    b_ls:  (C,)   en_log_sigma bias
    std_z: (B, C) reparameterization noise; if None it is sampled from
           jax.random.normal(key, ...) (PyTorch randn_like semantics).
    Returns (z, mu, sigma), each (B, C).
    """
    B, C = x.shape
    dtype = x.dtype

    if std_z is None:
        if key is None:
            raise ValueError("std_z=None requires a PRNG `key` to sample the noise.")
        std_z = jax.random.normal(key, (B, C), dtype)

    # Biases as (1, C) rows for lane-broadcast adds (metadata-only reshape).
    b_mu2 = b_mu.reshape(1, C)
    b_ls2 = b_ls.reshape(1, C)

    act_item = jnp.dtype(dtype).itemsize
    w_item = jnp.dtype(w_mu.dtype).itemsize

    # ---- VMEM budgeting (per TPU generation, fallback = 64 MiB) -------------
    capacity = _vmem_capacity_bytes()
    budget = int(0.6 * capacity)

    # Resident weights + biases: the pipeline still allocates 2 buffers per
    # input even with a constant index_map.
    weight_bytes = 2 * 2 * (C * C + C) * w_item
    # Per batch row: double-buffered x / std_z streams and z / mu / sigma
    # outputs, plus in-kernel f32 temporaries (mu, log_sigma_2, sigma, z).
    row_bytes = 2 * 5 * C * act_item + 4 * C * 4
    # TODO(synk): for very large C (f32 weights approaching the budget) the
    # weights should be N-tiled with a second grid axis or stored as bf16.

    avail = budget - weight_bytes
    if avail >= 8 * row_bytes:
        max_rows = max(8, (avail // row_bytes) // 8 * 8)
    else:
        max_rows = 8

    # ---- Batch tile: multiple of 8 sublanes; >= 2 grid steps when B > 8 so
    # v7x's second TensorCore gets work; capped by block_b and VMEM budget.
    if B <= 8:
        TB = B  # full-extent block (always legal)
    else:
        TB = min(block_b, _round_up(B, 8), _round_up(pl.cdiv(B, 2), 8), max_rows)
        TB = max(TB, 8)
    grid = (pl.cdiv(B, TB),)

    footprint = weight_bytes + TB * row_bytes
    vmem_limit = max(2 * footprint, 16 << 20)
    vmem_limit = min(vmem_limit, int(0.7 * capacity))
    vmem_limit = max(vmem_limit, footprint + (1 << 20))  # never below footprint
    vmem_limit = int(min(vmem_limit, capacity))

    # Advisory cost for XLA scheduling of the inlined custom call.
    flops = 2 * 2 * B * C * C + 4 * B * C
    bytes_accessed = act_item * 5 * B * C + w_item * 2 * (C * C + C)
    cost = pl.CostEstimate(flops=flops, transcendentals=B * C,
                           bytes_accessed=bytes_accessed)

    out_sds = jax.ShapeDtypeStruct((B, C), dtype)
    act_spec = pl.BlockSpec((TB, C), lambda i: (i, 0))
    w_spec = pl.BlockSpec((C, C), lambda i: (0, 0))   # VMEM-resident
    b_spec = pl.BlockSpec((1, C), lambda i: (0, 0))   # VMEM-resident

    z, mu, sigma = pl.pallas_call(
        _gaussian_kernel,
        out_shape=(out_sds, out_sds, out_sds),
        grid=grid,
        in_specs=[act_spec, w_spec, b_spec, w_spec, b_spec, act_spec],
        out_specs=(act_spec, act_spec, act_spec),
        compiler_params=pltpu.CompilerParams(
            dimension_semantics=("parallel",),
            vmem_limit_bytes=vmem_limit,
        ),
        cost_estimate=cost,
    )(x, w_mu, b_mu2, w_ls, b_ls2, std_z)

    return z, mu, sigma


def _reference(x, w_mu, b_mu, w_ls, b_ls, std_z):
    mu = x @ w_mu + b_mu
    log_sigma_2 = x @ w_ls + b_ls
    sigma = jnp.exp(0.5 * log_sigma_2)
    z = mu + sigma * std_z
    return z, mu, sigma


def _run_case(key, B, C):
    ks = jax.random.split(key, 6)
    bound = 1.0 / (C ** 0.5)  # nn.Linear default init range
    x = jax.random.normal(ks[0], (B, C), jnp.float32)
    w_mu = jax.random.uniform(ks[1], (C, C), jnp.float32, -bound, bound)
    b_mu = jax.random.uniform(ks[2], (C,), jnp.float32, -bound, bound)
    w_ls = jax.random.uniform(ks[3], (C, C), jnp.float32, -bound, bound)
    b_ls = jax.random.uniform(ks[4], (C,), jnp.float32, -bound, bound)
    std_z = jax.random.normal(ks[5], (B, C), jnp.float32)

    z, mu, sigma = mini_simple_gaussian(x, w_mu, b_mu, w_ls, b_ls, std_z)
    jax.block_until_ready((z, mu, sigma))

    z_r, mu_r, sigma_r = _reference(x, w_mu, b_mu, w_ls, b_ls, std_z)
    assert jnp.allclose(mu, mu_r, atol=1e-5, rtol=1e-5)
    assert jnp.allclose(sigma, sigma_r, atol=1e-5, rtol=1e-5)
    assert jnp.allclose(z, z_r, atol=1e-5, rtol=1e-5)


if __name__ == "__main__":
    key = jax.random.PRNGKey(0)
    k0, k1, k2 = jax.random.split(key, 3)
    # Shapes consistent with miniSimpleGaussian(mid_ch): Linear(mid_ch, mid_ch).
    _run_case(k0, B=8, C=32)    # shipped small shape (single grid step)
    _run_case(k1, B=19, C=40)   # ragged batch edge: 2 grid steps, masked tail

    # std_z=None path (PyTorch samples randn_like) — shape / finiteness check.
    x = jax.random.normal(k2, (8, 32), jnp.float32)
    w_eye = jnp.eye(32, dtype=jnp.float32)
    b_zero = jnp.zeros((32,), jnp.float32)
    z, mu, sigma = mini_simple_gaussian(x, w_eye, b_zero, w_eye, b_zero, None,
                                        key=jax.random.PRNGKey(1))
    jax.block_until_ready(z)
    assert z.shape == (8, 32) and bool(jnp.all(jnp.isfinite(z)))

    print("KERNEL_OK")
</pallas_src>

<mosaic_0001>
module attributes {stable_mosaic.version = 11 : i64} {
  func.func @_gaussian_kernel(%arg0: i32, %arg1: memref<8x32xf32, #tpu.memory_space<vmem>>, %arg2: memref<32x32xf32, #tpu.memory_space<vmem>>, %arg3: memref<1x32xf32, #tpu.memory_space<vmem>>, %arg4: memref<32x32xf32, #tpu.memory_space<vmem>>, %arg5: memref<1x32xf32, #tpu.memory_space<vmem>>, %arg6: memref<8x32xf32, #tpu.memory_space<vmem>>, %arg7: memref<8x32xf32, #tpu.memory_space<vmem>>, %arg8: memref<8x32xf32, #tpu.memory_space<vmem>>, %arg9: memref<8x32xf32, #tpu.memory_space<vmem>>) attributes {dimension_semantics = [#tpu.dimension_semantics<parallel>], iteration_bounds = array<i64: 1>, scalar_prefetch = 0 : i64, scratch_operands = 0 : i64, tpu.core_type = #tpu.core_type<tc>, window_params = [{transform_indices = @transform_0, window_bounds = array<i64: 8, 32>}, {pipeline_mode = #tpu.pipeline_mode<synchronous>, transform_indices = @transform_1, window_bounds = array<i64: 32, 32>}, {pipeline_mode = #tpu.pipeline_mode<synchronous>, transform_indices = @transform_2, window_bounds = array<i64: 1, 32>}, {pipeline_mode = #tpu.pipeline_mode<synchronous>, transform_indices = @transform_3, window_bounds = array<i64: 32, 32>}, {pipeline_mode = #tpu.pipeline_mode<synchronous>, transform_indices = @transform_4, window_bounds = array<i64: 1, 32>}, {transform_indices = @transform_5, window_bounds = array<i64: 8, 32>}, {transform_indices = @transform_6, window_bounds = array<i64: 8, 32>}, {transform_indices = @transform_7, window_bounds = array<i64: 8, 32>}, {transform_indices = @transform_8, window_bounds = array<i64: 8, 32>}]} {
    %c0 = arith.constant 0 : index
    %c0_0 = arith.constant 0 : index
    %0 = vector.load %arg1[%c0, %c0_0] : memref<8x32xf32, #tpu.memory_space<vmem>>, vector<8x32xf32>
    %c0_1 = arith.constant 0 : index
    %c0_2 = arith.constant 0 : index
    %1 = vector.load %arg2[%c0_1, %c0_2] : memref<32x32xf32, #tpu.memory_space<vmem>>, vector<32x32xf32>
    %cst = arith.constant dense<0.000000e+00> : vector<8x32xf32>
    %2 = tpu.matmul %0, %1, %cst {dimension_numbers = #tpu.dot_dimension_numbers<[1], [0], [0], [1], [0, 0, 1, 1], [], []>} : vector<8x32xf32>, vector<32x32xf32>, vector<8x32xf32> -> vector<8x32xf32>
    %c0_3 = arith.constant 0 : index
    %c0_4 = arith.constant 0 : index
    %3 = vector.load %arg3[%c0_3, %c0_4] : memref<1x32xf32, #tpu.memory_space<vmem>>, vector<1x32xf32>
    %4 = vector.broadcast %3 : vector<1x32xf32> to vector<8x32xf32>
    %5 = arith.addf %2, %4 : vector<8x32xf32>
    %c0_5 = arith.constant 0 : index
    %c0_6 = arith.constant 0 : index
    %6 = vector.load %arg4[%c0_5, %c0_6] : memref<32x32xf32, #tpu.memory_space<vmem>>, vector<32x32xf32>
    %cst_7 = arith.constant dense<0.000000e+00> : vector<8x32xf32>
    %7 = tpu.matmul %0, %6, %cst_7 {dimension_numbers = #tpu.dot_dimension_numbers<[1], [0], [0], [1], [0, 0, 1, 1], [], []>} : vector<8x32xf32>, vector<32x32xf32>, vector<8x32xf32> -> vector<8x32xf32>
    %c0_8 = arith.constant 0 : index
    %c0_9 = arith.constant 0 : index
    %8 = vector.load %arg5[%c0_8, %c0_9] : memref<1x32xf32, #tpu.memory_space<vmem>>, vector<1x32xf32>
    %9 = vector.broadcast %8 : vector<1x32xf32> to vector<8x32xf32>
    %10 = arith.addf %7, %9 : vector<8x32xf32>
    %cst_10 = arith.constant 5.000000e-01 : f32
    %11 = vector.broadcast %cst_10 : f32 to vector<8x32xf32>
    %12 = arith.mulf %11, %10 : vector<8x32xf32>
    %13 = math.exp %12 : vector<8x32xf32>
    %c0_11 = arith.constant 0 : index
    %c0_12 = arith.constant 0 : index
    %14 = vector.load %arg6[%c0_11, %c0_12] : memref<8x32xf32, #tpu.memory_space<vmem>>, vector<8x32xf32>
    %15 = arith.mulf %13, %14 : vector<8x32xf32>
    %16 = arith.addf %5, %15 : vector<8x32xf32>
    %c0_13 = arith.constant 0 : index
    %c0_14 = arith.constant 0 : index
    %17 = vector.load %arg8[%c0_13, %c0_14] : memref<8x32xf32, #tpu.memory_space<vmem>>, vector<8x32xf32>
    tpu.vector_store %arg8[%c0_13, %c0_14], %5 {strides = array<i32>} : memref<8x32xf32, #tpu.memory_space<vmem>>, vector<8x32xf32>,
    %c0_15 = arith.constant 0 : index
    %c0_16 = arith.constant 0 : index
    %18 = vector.load %arg9[%c0_15, %c0_16] : memref<8x32xf32, #tpu.memory_space<vmem>>, vector<8x32xf32>
    tpu.vector_store %arg9[%c0_15, %c0_16], %13 {strides = array<i32>} : memref<8x32xf32, #tpu.memory_space<vmem>>, vector<8x32xf32>,
    %c0_17 = arith.constant 0 : index
    %c0_18 = arith.constant 0 : index
    %19 = vector.load %arg7[%c0_17, %c0_18] : memref<8x32xf32, #tpu.memory_space<vmem>>, vector<8x32xf32>
    tpu.vector_store %arg7[%c0_17, %c0_18], %16 {strides = array<i32>} : memref<8x32xf32, #tpu.memory_space<vmem>>, vector<8x32xf32>,
    return
  }
  func.func @transform_0(%arg0: i32) -> (i32, i32) {
    %c0_i32 = arith.constant 0 : i32
    %c0_i32_0 = arith.constant 0 : i32
    return %arg0, %c0_i32 : i32, i32
  }
  func.func @transform_1(%arg0: i32) -> (i32, i32) {
    %c0_i32 = arith.constant 0 : i32
    %c0_i32_0 = arith.constant 0 : i32
    %c0_i32_1 = arith.constant 0 : i32
    return %c0_i32, %c0_i32_0 : i32, i32
  }
  func.func @transform_2(%arg0: i32) -> (i32, i32) {
    %c0_i32 = arith.constant 0 : i32
    %c0_i32_0 = arith.constant 0 : i32
    %c0_i32_1 = arith.constant 0 : i32
    return %c0_i32, %c0_i32_0 : i32, i32
  }
  func.func @transform_3(%arg0: i32) -> (i32, i32) {
    %c0_i32 = arith.constant 0 : i32
    %c0_i32_0 = arith.constant 0 : i32
    %c0_i32_1 = arith.constant 0 : i32
    return %c0_i32, %c0_i32_0 : i32, i32
  }
  func.func @transform_4(%arg0: i32) -> (i32, i32) {
    %c0_i32 = arith.constant 0 : i32
    %c0_i32_0 = arith.constant 0 : i32
    %c0_i32_1 = arith.constant 0 : i32
    return %c0_i32, %c0_i32_0 : i32, i32
  }
  func.func @transform_5(%arg0: i32) -> (i32, i32) {
    %c0_i32 = arith.constant 0 : i32
    %c0_i32_0 = arith.constant 0 : i32
    return %arg0, %c0_i32 : i32, i32
  }
  func.func @transform_6(%arg0: i32) -> (i32, i32) {
    %c0_i32 = arith.constant 0 : i32
    %c0_i32_0 = arith.constant 0 : i32
    return %arg0, %c0_i32 : i32, i32
  }
  func.func @transform_7(%arg0: i32) -> (i32, i32) {
    %c0_i32 = arith.constant 0 : i32
    %c0_i32_0 = arith.constant 0 : i32
    return %arg0, %c0_i32 : i32, i32
  }
  func.func @transform_8(%arg0: i32) -> (i32, i32) {
    %c0_i32 = arith.constant 0 : i32
    %c0_i32_0 = arith.constant 0 : i32
    return %arg0, %c0_i32 : i32, i32
  }
}

</mosaic_0001>

<llo_original>
// kernel: mini_simple_gaussian.1
$region0: #{mini_simple_gaussian.1}
  #allocation0 [shape = 'u32[]', space=smem, size = 0x4, offset = 0x4, fixed_abs, tag = 'smem constant byte address 0x4 - core index']
  #allocation1 [shape = 'u32[72,128]{1,0:T(1,128)}', space=vmem, size = 0x9000, scoped, tag = 'internal scratch']
  %s0 = inlined_call_operand.hbm [shape: f32[8,32], index: 0, kind: input, shape index: {}]
  %s1 = inlined_call_operand.hbm [shape: f32[32,32], index: 1, kind: input, shape index: {}]
  %s2 = inlined_call_operand.vmem [shape: f32[1,32], index: 2, kind: input, shape index: {}]
  %s3 = inlined_call_operand.hbm [shape: f32[32,32], index: 3, kind: input, shape index: {}]
  %s4 = inlined_call_operand.vmem [shape: f32[1,32], index: 4, kind: input, shape index: {}]
  %s5 = inlined_call_operand.hbm [shape: f32[8,32], index: 5, kind: input, shape index: {}]
  %s6 = inlined_call_operand.hbm [shape: f32[8,32], index: 6, kind: output, shape index: {0}]
  %s7 = inlined_call_operand.hbm [shape: f32[8,32], index: 7, kind: output, shape index: {1}]
  %s8 = inlined_call_operand.hbm [shape: f32[8,32], index: 8, kind: output, shape index: {2}]
  %9 = xla_tuple %s6, %s7, %s8
  %s10 = sld [smem:[#allocation0]]
  $region66: #{mini_simple_gaussian.1} parent=0
    _
  %s12 = ssub.s32 1, %s10
  %s13 = scalar_select 0, %s12, %s10
  $region1: #{mini_simple_gaussian.1} parent=0
    #allocation2 [shape = 'u8[4096]{0}', space=vmem, size = 0x1000, scoped, tag = 'input window, operand 0, single buffered']
    #allocation3 [shape = 's32[1]{0}', space=sflag, size = 0x4, scoped, tag = 'scoped memory for mini_simple_gaussian.1']
    #allocation4 [shape = 's32[1]{0}', space=sflag, size = 0x4, scoped, tag = 'scoped memory for mini_simple_gaussian.1']
    #allocation5 [shape = 'u8[16384]{0}', space=vmem, size = 0x4000, scoped, tag = 'input window, operand 1, single buffered']
    #allocation6 [shape = 's32[1]{0}', space=sflag, size = 0x4, scoped, tag = 'scoped memory for mini_simple_gaussian.1']
    #allocation7 [shape = 'u8[16384]{0}', space=vmem, size = 0x4000, scoped, tag = 'input window, operand 3, single buffered']
    #allocation8 [shape = 'u8[4096]{0}', space=vmem, size = 0x1000, scoped, tag = 'input window, operand 5, single buffered']
    #allocation9 [shape = 's32[1]{0}', space=sflag, size = 0x4, scoped, tag = 'scoped memory for mini_simple_gaussian.1']
    #allocation10 [shape = 'u8[4096]{0}', space=vmem, size = 0x1000, scoped, tag = 'output window, operand 0, single buffered']
    #allocation11 [shape = 'u8[4096]{0}', space=vmem, size = 0x1000, scoped, tag = 'output window, operand 1, single buffered']
    #allocation12 [shape = 's32[1]{0}', space=sflag, size = 0x4, scoped, tag = 'scoped memory for mini_simple_gaussian.1']
    #allocation13 [shape = 'u8[4096]{0}', space=vmem, size = 0x1000, scoped, tag = 'output window, operand 2, single buffered']
    %14 = vsyncpa [#allocation3], 0
    %15 = vsyncpa [#allocation6], 0
    %16 = vsyncpa [#allocation9], 0
    %17 = vsyncpa [#allocation4], 0
    %18 = vsyncpa [#allocation12], 0
    // Predicated region
    $region2: #{mini_simple_gaussian.1} parent=1 // pred_check
      _
    $region3: #{mini_simple_gaussian.1} parent=1 // pred_check_branch
      %20 = sbr.rel (0) target = $region5
    $region4: #{mini_simple_gaussian.1} parent=1 // pred_region
      %22 = vsyncadd [#allocation3], 0
      %s24 = sshll.u32 %s0, 4
      %s25 = int_to_ptr.hbm [resolvable:$true] %s24
      %s26 = sshll.u32 [#allocation2], 4
      %s27 = int_to_ptr.vmem [resolvable:$true] %s26
      %29 = dma.hbm_to_vmem [thread:$0]  %s25, 128, %s27, [#allocation3]
    $region5: #{mini_simple_gaussian.1} parent=1 // pred_fallthru
      _
    // Predicated region
    $region6: #{mini_simple_gaussian.1} parent=1 // pred_check
      _
    $region7: #{mini_simple_gaussian.1} parent=1 // pred_check_branch
      %31 = sbr.rel (0) target = $region9
    $region8: #{mini_simple_gaussian.1} parent=1 // pred_region
      %33 = vsyncadd [#allocation6], 0
      %s34 = sshll.u32 %s1, 4
      %s35 = int_to_ptr.hbm [resolvable:$true] %s34
      %s36 = sshll.u32 [#allocation5], 4
      %s37 = int_to_ptr.vmem [resolvable:$true] %s36
      %42 = dma.hbm_to_vmem [thread:$0]  %s35, 512, %s37, [#allocation6], 128, 128, 8
    $region9: #{mini_simple_gaussian.1} parent=1 // pred_fallthru
      _
    // Predicated region
    $region10: #{mini_simple_gaussian.1} parent=1 // pred_check
      _
    $region11: #{mini_simple_gaussian.1} parent=1 // pred_check_branch
      %44 = sbr.rel (0) target = $region13
    $region12: #{mini_simple_gaussian.1} parent=1 // pred_region
      _
    $region13: #{mini_simple_gaussian.1} parent=1 // pred_fallthru
      _
    // Predicated region
    $region14: #{mini_simple_gaussian.1} parent=1 // pred_check
      _
    $region15: #{mini_simple_gaussian.1} parent=1 // pred_check_branch
      %46 = sbr.rel (0) target = $region17
    $region16: #{mini_simple_gaussian.1} parent=1 // pred_region
      %48 = vsyncadd [#allocation6], 0
      %s49 = sshll.u32 %s3, 4
      %s50 = int_to_ptr.hbm [resolvable:$true] %s49
      %s51 = sshll.u32 [#allocation7], 4
      %s52 = int_to_ptr.vmem [resolvable:$true] %s51
      %57 = dma.hbm_to_vmem [thread:$0]  %s50, 512, %s52, [#allocation6], 128, 128, 8
    $region17: #{mini_simple_gaussian.1} parent=1 // pred_fallthru
      _
    // Predicated region
    $region18: #{mini_simple_gaussian.1} parent=1 // pred_check
      _
    $region19: #{mini_simple_gaussian.1} parent=1 // pred_check_branch
      %59 = sbr.rel (0) target = $region21
    $region20: #{mini_simple_gaussian.1} parent=1 // pred_region
      _
    $region21: #{mini_simple_gaussian.1} parent=1 // pred_fallthru
      _
    // Predicated region
    $region22: #{mini_simple_gaussian.1} parent=1 // pred_check
      _
    $region23: #{mini_simple_gaussian.1} parent=1 // pred_check_branch
      %61 = sbr.rel (0) target = $region25
    $region24: #{mini_simple_gaussian.1} parent=1 // pred_region
      %63 = vsyncadd [#allocation9], 0
      %s65 = sshll.u32 %s5, 4
      %s66 = int_to_ptr.hbm [resolvable:$true] %s65
      %s67 = sshll.u32 [#allocation8], 4
      %s68 = int_to_ptr.vmem [resolvable:$true] %s67
      %70 = dma.hbm_to_vmem [thread:$0]  %s66, 128, %s68, [#allocation9]
    $region25: #{mini_simple_gaussian.1} parent=1 // pred_fallthru
      _
    // Predicated region
    $region26: #{mini_simple_gaussian.1} parent=1 // pred_check
      _
    $region27: #{mini_simple_gaussian.1} parent=1 // pred_check_branch
      %72 = sbr.rel (0) target = $region29
    $region28: #{mini_simple_gaussian.1} parent=1 // pred_region
      %74 = dma.done [#allocation3], 128
    $region29: #{mini_simple_gaussian.1} parent=1 // pred_fallthru
      _
    // Predicated region
    $region30: #{mini_simple_gaussian.1} parent=1 // pred_check
      _
    $region31: #{mini_simple_gaussian.1} parent=1 // pred_check_branch
      %76 = sbr.rel (0) target = $region33
    $region32: #{mini_simple_gaussian.1} parent=1 // pred_region
      %78 = dma.done [#allocation6], 512
    $region33: #{mini_simple_gaussian.1} parent=1 // pred_fallthru
      _
    // Predicated region
    $region34: #{mini_simple_gaussian.1} parent=1 // pred_check
      _
    $region35: #{mini_simple_gaussian.1} parent=1 // pred_check_branch
      %80 = sbr.rel (0) target = $region37
    $region36: #{mini_simple_gaussian.1} parent=1 // pred_region
      %82 = dma.done [#allocation6], 512
    $region37: #{mini_simple_gaussian.1} parent=1 // pred_fallthru
      _
    // Predicated region
    $region38: #{mini_simple_gaussian.1} parent=1 // pred_check
      _
    $region39: #{mini_simple_gaussian.1} parent=1 // pred_check_branch
      %84 = sbr.rel (0) target = $region41
    $region40: #{mini_simple_gaussian.1} parent=1 // pred_region
      %86 = dma.done [#allocation9], 128
    $region41: #{mini_simple_gaussian.1} parent=1 // pred_fallthru
      _
    %v87 = vld [vmem:[#allocation2] sm:$0xff]
    %v88 = vld [vmem:[#allocation5] sm:$0xff]
    %v89 = vld [vmem:[#allocation5 + $0x8] sm:$0xff]
    %v90 = vld [vmem:[#allocation5 + $0x10] sm:$0xff]
    %v91 = vld [vmem:[#allocation5 + $0x18] sm:$0xff]
    %v92 = vld [vmem:[%s2] sm:$0x1]
    %v94 = vperm.slane %v92, 0
    %vm96 = vcmask 261120
    %v98 = vsel %vm96, %v87, 0
    %100 = vmatpush.msra.mxu0 0.0
    %101 = vmatpush.msra.mxu0 0.0
    %102 = vmatpush.msra.mxu0 0.0
    %103 = vmatpush.msra.mxu0 0.0
    %104 = vmatpush.msra.mxu0 0.0
    %105 = vmatpush.msra.mxu0 0.0
    %106 = vmatpush.msra.mxu0 0.0
    %107 = vmatpush.msra.mxu0 0.0
    %108 = vmatpush.msra.mxu0 0.0
    %109 = vmatpush.msra.mxu0 0.0
    %110 = vmatpush.msra.mxu0 0.0
    %111 = vmatpush.msra.mxu0 0.0
    %112 = vmatpush.msra.mxu0 %v91
    %113 = vmatpush.msra.mxu0 %v90
    %114 = vmatpush.msra.mxu0 %v89
    %115 = vmatpush.msra.mxu0 %v88
    %116 = vmatmul.f32.gmra.mxu0 %v98
    %v117 = vpop.f32.mrf.mxu0
    %v118 = vadd.f32 %v94, %v117
    %119 = vdwg.mxu0
    %v120 = vld [vmem:[#allocation7] sm:$0xff]
    %v121 = vld [vmem:[#allocation7 + $0x8] sm:$0xff]
    %v122 = vld [vmem:[#allocation7 + $0x10] sm:$0xff]
    %v123 = vld [vmem:[#allocation7 + $0x18] sm:$0xff]
    %v124 = vld [vmem:[%s4] sm:$0x1]
    %v126 = vperm.slane %v124, 0
    %128 = vmatpush.msra.mxu0 0.0
    %129 = vmatpush.msra.mxu0 0.0
    %130 = vmatpush.msra.mxu0 0.0
    %131 = vmatpush.msra.mxu0 0.0
    %132 = vmatpush.msra.mxu0 0.0
    %133 = vmatpush.msra.mxu0 0.0
    %134 = vmatpush.msra.mxu0 0.0
    %135 = vmatpush.msra.mxu0 0.0
    %136 = vmatpush.msra.mxu0 0.0
    %137 = vmatpush.msra.mxu0 0.0
    %138 = vmatpush.msra.mxu0 0.0
    %139 = vmatpush.msra.mxu0 0.0
    %140 = vmatpush.msra.mxu0 %v123
    %141 = vmatpush.msra.mxu0 %v122
    %142 = vmatpush.msra.mxu0 %v121
    %143 = vmatpush.msra.mxu0 %v120
    %144 = vmatmul.f32.gmra.mxu0 %v98
    %v145 = vpop.f32.mrf.mxu0
    %v146 = vadd.f32 %v126, %v145
    %147 = vdwg.mxu0
    %v148 = vmul.f32 %v146, 0.5
    %v149 = vmul.f32 %v148, 1.442695
    %v150 = vpow.pop %v149
    %v151 = vld [vmem:[#allocation8] sm:$0xff]
    %v152 = vmul.f32 %v150, %v151
    %v153 = vadd.f32 %v118, %v152
    %154 = vst.msk [vmem:[#allocation11] sm:$0xff] %vm96, %v118
    %155 = vst.msk [vmem:[#allocation13] sm:$0xff] %vm96, %v150
    %156 = vst.msk [vmem:[#allocation10] sm:$0xff] %vm96, %v153
    // Predicated region
    $region42: #{mini_simple_gaussian.1} parent=1 // pred_check
      _
    $region43: #{mini_simple_gaussian.1} parent=1 // pred_check_branch
      %158 = sbr.rel (0) target = $region45
    $region44: #{mini_simple_gaussian.1} parent=1 // pred_region
      %160 = vsyncadd [#allocation4], 0
      %s162 = sshll.u32 [#allocation10], 4
      %s163 = int_to_ptr.vmem [resolvable:$true] %s162
      %s164 = sshll.u32 %s6, 4
      %s165 = int_to_ptr.hbm [resolvable:$true] %s164
      %167 = dma.vmem_to_hbm [thread:$0]  %s163, 128, %s165, [#allocation4]
    $region45: #{mini_simple_gaussian.1} parent=1 // pred_fallthru
      _
    // Predicated region
    $region46: #{mini_simple_gaussian.1} parent=1 // pred_check
      _
    $region47: #{mini_simple_gaussian.1} parent=1 // pred_check_branch
      %169 = sbr.rel (0) target = $region49
    $region48: #{mini_simple_gaussian.1} parent=1 // pred_region
      %171 = vsyncadd [#allocation12], 0
      %s173 = sshll.u32 [#allocation11], 4
      %s174 = int_to_ptr.vmem [resolvable:$true] %s173
      %s175 = sshll.u32 %s7, 4
      %s176 = int_to_ptr.hbm [resolvable:$true] %s175
      %178 = dma.vmem_to_hbm [thread:$0]  %s174, 128, %s176, [#allocation12]
    $region49: #{mini_simple_gaussian.1} parent=1 // pred_fallthru
      _
    // Predicated region
    $region50: #{mini_simple_gaussian.1} parent=1 // pred_check
      _
    $region51: #{mini_simple_gaussian.1} parent=1 // pred_check_branch
      %180 = sbr.rel (0) target = $region53
    $region52: #{mini_simple_gaussian.1} parent=1 // pred_region
      %182 = vsyncadd [#allocation12], 0
      %s184 = sshll.u32 [#allocation13], 4
      %s185 = int_to_ptr.vmem [resolvable:$true] %s184
      %s186 = sshll.u32 %s8, 4
      %s187 = int_to_ptr.hbm [resolvable:$true] %s186
      %189 = dma.vmem_to_hbm [thread:$0]  %s185, 128, %s187, [#allocation12]
    $region53: #{mini_simple_gaussian.1} parent=1 // pred_fallthru
      _
    // Predicated region
    $region54: #{mini_simple_gaussian.1} parent=1 // pred_check
      _
    $region55: #{mini_simple_gaussian.1} parent=1 // pred_check_branch
      %191 = sbr.rel (0) target = $region57
    $region56: #{mini_simple_gaussian.1} parent=1 // pred_region
      %193 = dma.done [#allocation4], 128
    $region57: #{mini_simple_gaussian.1} parent=1 // pred_fallthru
      _
    // Predicated region
    $region58: #{mini_simple_gaussian.1} parent=1 // pred_check
      _
    $region59: #{mini_simple_gaussian.1} parent=1 // pred_check_branch
      %195 = sbr.rel (0) target = $region61
    $region60: #{mini_simple_gaussian.1} parent=1 // pred_region
      %197 = dma.done [#allocation12], 128
    $region61: #{mini_simple_gaussian.1} parent=1 // pred_fallthru
      _
    // Predicated region
    $region62: #{mini_simple_gaussian.1} parent=1 // pred_check
      _
    $region63: #{mini_simple_gaussian.1} parent=1 // pred_check_branch
      %199 = sbr.rel (0) target = $region65
    $region64: #{mini_simple_gaussian.1} parent=1 // pred_region
      %201 = dma.done [#allocation12], 128
    $region65: #{mini_simple_gaussian.1} parent=1 // pred_fallthru
      _
    %202 = vsyncpa [#allocation3], 1
    %203 = vsyncpa [#allocation6], 1
    %204 = vsyncpa [#allocation9], 1
    %205 = vsyncpa [#allocation4], 1
    %206 = vsyncpa [#allocation12], 1

</llo_original>
